<compile_context>
chip_gen: v6e
topology: v6e:2x2x1
jax: 0.10.0
libtpu: 0.0.40
codegen_flags: <defaults>
</compile_context>

<pallas_src>
import functools
import math

import jax
import jax.numpy as jnp
from jax.experimental import pallas as pl
from jax.experimental.pallas import tpu as pltpu


# ----------------------------------------------------------------------------- utils
def _rup(x, m):
    return ((x + m - 1) // m) * m


def _tm_cap():
    # v5e MXU is 4x128^2 -> 256-wide tiles give no benefit there; v6e/v7x are 2x256^2.
    try:
        kind = jax.devices()[0].device_kind.lower()
    except Exception:
        return 256
    return 128 if ("v5 lite" in kind or "v5e" in kind) else 256


_TM_MAX = _tm_cap()


def _pick_tm(M):
    if _TM_MAX >= 256 and M % 256 == 0:
        return 256
    if M % 128 == 0:
        return 128
    return M  # tiny / irregular M (e.g. coarse level M=8): single full-extent block


# ----------------------------------------------------------------------------- Pallas: matmul + fused epilogue
def _mm_bias_kernel(a_ref, b_ref, bias_ref, o_ref, *, relu, scale):
    acc = jnp.dot(a_ref[...], b_ref[...], preferred_element_type=jnp.float32)
    acc = acc + bias_ref[...]                       # (1, N) broadcast
    if scale is not None:
        acc = acc * scale
    if relu:
        acc = jnp.maximum(acc, 0.0)
    o_ref[...] = acc


def matmul_bias_act(a, b, bias, *, relu=False, scale=None):
    """act((a @ b) + bias): bf16 MXU operands, f32 accumulation, epilogue fused in-kernel."""
    M, K = a.shape
    K2, N = b.shape
    assert K == K2
    a = a.astype(jnp.bfloat16)
    b = b.astype(jnp.bfloat16)
    bias2d = bias.reshape(1, N).astype(jnp.float32)
    Np = N
    if N < 8:                                       # degenerate lane count (e.g. flow head Cout=1)
        Np = 128
        b = jnp.pad(b, ((0, 0), (0, Np - N)))
        bias2d = jnp.pad(bias2d, ((0, 0), (0, Np - N)))
    tm = _pick_tm(M)
    out = pl.pallas_call(
        functools.partial(_mm_bias_kernel, relu=relu, scale=scale),
        out_shape=jax.ShapeDtypeStruct((M, Np), jnp.float32),
        grid_spec=pltpu.PrefetchScalarGridSpec(
            num_scalar_prefetch=0,
            grid=(M // tm,),
            in_specs=[
                pl.BlockSpec((tm, K), lambda i: (i, 0)),    # full-extent K, no padding
                pl.BlockSpec((K, Np), lambda i: (0, 0)),    # full weight, resident across steps
                pl.BlockSpec((1, Np), lambda i: (0, 0)),    # bias
            ],
            out_specs=pl.BlockSpec((tm, Np), lambda i: (i, 0)),
        ),
        compiler_params=pltpu.CompilerParams(dimension_semantics=("parallel",)),
    )(a, b, bias2d)
    return out if Np == N else out[:, :N]


# ----------------------------------------------------------------------------- conv2d via im2col + fused matmul
def conv2d(x, w, b, stride=(1, 1), padding=(0, 0), relu=False, scale=None):
    B, H, W, Cin = x.shape
    kh, kw, _, Cout = w.shape
    sh, sw = stride
    ph, pw = padding
    Ho = (H + 2 * ph - kh) // sh + 1
    Wo = (W + 2 * pw - kw) // sw + 1
    xb = x.astype(jnp.bfloat16)                     # bf16 patches -> half the im2col HBM traffic
    if kh == 1 and kw == 1 and stride == (1, 1) and padding == (0, 0):
        patches = xb.reshape(B * H * W, Cin)
    else:
        xp = jnp.pad(xb, ((0, 0), (ph, ph), (pw, pw), (0, 0)))
        cols = []
        for i in range(kh):
            for j in range(kw):
                cols.append(xp[:, i:i + (Ho - 1) * sh + 1:sh, j:j + (Wo - 1) * sw + 1:sw, :])
        patches = jnp.concatenate(cols, axis=-1).reshape(B * Ho * Wo, kh * kw * Cin)
    out = matmul_bias_act(patches, w.reshape(kh * kw * Cin, Cout), b, relu=relu, scale=scale)
    return out.reshape(B, Ho, Wo, Cout)


def conv(p, x, stride=(1, 1), padding=(0, 0), relu=False, scale=None):
    return conv2d(x, p["w"], p["b"], stride=stride, padding=padding, relu=relu, scale=scale)


# ----------------------------------------------------------------------------- Pallas: grouped 1D correlation
def _gcorr_kernel(f1_ref, f2_ref, o_ref, *, inv_sqrt_c):
    a = f1_ref[0]            # (H, W, Cg) bf16
    bm = f2_ref[0]           # (H, W, Cg) bf16
    out = jax.lax.dot_general(a, bm, (((2,), (2,)), ((0,), (0,))),
                              preferred_element_type=jnp.float32)   # (H, W, W)
    o_ref[0] = out * inv_sqrt_c


def grouped_corr_volume(f1, f2, groups):
    """corr[b,g,h,w1,w2] = <f1[b,:,h,w1], f2[b,:,h,w2]>_g / sqrt(Cg)."""
    B, H, W, C = f1.shape
    Cg = C // groups

    def regroup(f):
        return (f.reshape(B, H, W, groups, Cg)
                 .transpose(0, 3, 1, 2, 4)
                 .reshape(B * groups, H, W, Cg)
                 .astype(jnp.bfloat16))

    a = regroup(f1)
    b = regroup(f2)
    kern = functools.partial(_gcorr_kernel, inv_sqrt_c=1.0 / math.sqrt(Cg))
    out = pl.pallas_call(
        kern,
        out_shape=jax.ShapeDtypeStruct((B * groups, H, W, W), jnp.float32),
        grid_spec=pltpu.PrefetchScalarGridSpec(
            num_scalar_prefetch=0,
            grid=(B * groups,),                              # 8 steps instead of B*G*H
            in_specs=[pl.BlockSpec((1, H, W, Cg), lambda i: (i, 0, 0, 0))] * 2,
            out_specs=pl.BlockSpec((1, H, W, W), lambda i: (i, 0, 0, 0)),
        ),
        compiler_params=pltpu.CompilerParams(dimension_semantics=("parallel",)),
    )(a, b)
    return out.reshape(B, groups, H, W, W)


def sample_corr(corr, coords, radius):
    """Linear (1D) sampling of the corr volume at coords + dx, dx in [-r, r], zero padding."""
    # TODO(synk): zero-padding semantics assumed for out-of-range lookups (grid_sample zeros).
    B, G, H, W1, W2 = corr.shape
    r = radius
    dx = jnp.arange(-r, r + 1, dtype=jnp.float32)
    x = coords[..., 0][:, None, :, :, None] + dx            # (B,1,H,W1,2r+1)
    x0 = jnp.floor(x)
    frac = x - x0
    x0i = x0.astype(jnp.int32)

    def gather(idx):
        valid = (idx >= 0) & (idx < W2)
        idx_c = jnp.clip(idx, 0, W2 - 1)
        idx_b = jnp.broadcast_to(idx_c, (B, G, H, W1, 2 * r + 1))
        vals = jnp.take_along_axis(corr, idx_b, axis=-1)
        return vals * jnp.broadcast_to(valid, vals.shape).astype(vals.dtype)

    v0 = gather(x0i)
    v1 = gather(x0i + 1)
    out = v0 * (1.0 - frac) + v1 * frac                      # (B,G,H,W1,2r+1)
    return out.transpose(0, 2, 3, 1, 4).reshape(B, H, W1, G * (2 * r + 1))


# ----------------------------------------------------------------------------- Pallas: lane-dense elementwise
def _elementwise_call(kernel, *arrays):
    """Run an elementwise kernel on same-shaped f32 arrays, flattened to (rows, 512) lane-dense tiles."""
    shape = arrays[0].shape
    total = arrays[0].size
    L = 512
    R = -(-total // L)
    padded = R * L
    flats = [jnp.pad(a.reshape(-1), (0, padded - total)).reshape(R, L) for a in arrays]
    Tr = R if R <= 256 else 256
    Rp = _rup(R, Tr)
    if Rp != R:
        flats = [jnp.pad(f, ((0, Rp - R), (0, 0))) for f in flats]
    out = pl.pallas_call(
        kernel,
        out_shape=jax.ShapeDtypeStruct((Rp, L), jnp.float32),
        grid_spec=pltpu.PrefetchScalarGridSpec(
            num_scalar_prefetch=0,
            grid=(Rp // Tr,),
            in_specs=[pl.BlockSpec((Tr, L), lambda i: (i, 0)) for _ in arrays],
            out_specs=pl.BlockSpec((Tr, L), lambda i: (i, 0)),
        ),
        compiler_params=pltpu.CompilerParams(dimension_semantics=("parallel",)),
    )(*flats)
    return out.reshape(-1)[:total].reshape(shape)


def _gru_kernel(z_ref, q_ref, h_ref, o_ref):
    z = jax.nn.sigmoid(z_ref[...])
    q = jnp.tanh(q_ref[...])
    h = h_ref[...]
    o_ref[...] = (1.0 - z) * h + z * q


def _sigmul_kernel(r_ref, h_ref, o_ref):
    o_ref[...] = jax.nn.sigmoid(r_ref[...]) * h_ref[...]


def gru_fuse(z_pre, q_pre, h):
    return _elementwise_call(_gru_kernel, z_pre, q_pre, h)


def gated_hidden(r_pre, h):
    return _elementwise_call(_sigmul_kernel, r_pre, h)


# ----------------------------------------------------------------------------- Pallas: convex upsample combine
def _upsample_kernel(m_ref, nb_ref, o_ref, *, S):
    m = m_ref[...]                                   # (T, 9*S)  channel c = k*S + s
    nb = nb_ref[...]                                 # (T, 9)
    taps = [m[:, k * S:(k + 1) * S] for k in range(9)]
    mx = taps[0]
    for t in taps[1:]:
        mx = jnp.maximum(mx, t)
    exps = [jnp.exp(t - mx) for t in taps]
    den = exps[0]
    for e in exps[1:]:
        den = den + e
    acc = exps[0] * nb[:, 0:1]
    for k in range(1, 9):
        acc = acc + exps[k] * nb[:, k:k + 1]
    o_ref[...] = acc / den                           # softmax(9) weighted neighbor sum, (T, S)


def convex_upsample(disp, mask, rate=(4, 4)):
    B, H, W, _ = disp.shape
    r0, r1 = rate
    S = r0 * r1
    M = B * H * W
    # mask channels are already in the reference order c = k*S + (r0_idx*r1 + r1_idx): no transpose needed.
    m_flat = mask.reshape(M, 9 * S)
    fp = jnp.pad(r1 * disp[..., 0], ((0, 0), (1, 1), (1, 1)))
    nbs = [fp[:, i:i + H, j:j + W] for i in range(3) for j in range(3)]
    nb = jnp.stack(nbs, axis=-1).reshape(M, 9)

    if M % 512 == 0:
        T = 512
    elif M % 256 == 0:
        T = 256
    elif M % 128 == 0:
        T = 128
    else:
        T = M
    out = pl.pallas_call(
        functools.partial(_upsample_kernel, S=S),
        out_shape=jax.ShapeDtypeStruct((M, S), jnp.float32),
        grid_spec=pltpu.PrefetchScalarGridSpec(
            num_scalar_prefetch=0,
            grid=(M // T,),
            in_specs=[
                pl.BlockSpec((T, 9 * S), lambda i: (i, 0)),
                pl.BlockSpec((T, 9), lambda i: (i, 0)),
            ],
            out_specs=pl.BlockSpec((T, S), lambda i: (i, 0)),
        ),
        compiler_params=pltpu.CompilerParams(dimension_semantics=("parallel",)),
    )(m_flat, nb)
    out = out.reshape(B, H, W, r0, r1).transpose(0, 1, 3, 2, 4).reshape(B, r0 * H, r1 * W, 1)
    return out


# ----------------------------------------------------------------------------- model sub-blocks
def fnet_forward(p, x):
    # TODO(synk): RepViT backbone replaced by a small synthetic conv pyramid with matching
    # per-level channels (16, 64, 256) and 4x resolution steps between levels.
    f_fine = conv(p["stem"], x, padding=(1, 1), relu=True)                       # /1,  16ch
    t = conv(p["d1a"], f_fine, stride=(2, 2), padding=(1, 1), relu=True)
    f_mid = conv(p["d1b"], t, stride=(2, 2), padding=(1, 1), relu=True)          # /4,  64ch
    t = conv(p["d2a"], f_mid, stride=(2, 2), padding=(1, 1), relu=True)
    f_coarse = conv(p["d2b"], t, stride=(2, 2), padding=(1, 1), relu=True)       # /16, 256ch
    return [f_coarse, f_mid, f_fine]   # == fnet(...)[::2][::-1]  (coarse -> fine)


def fusion_forward(p, prev_feat, cur_feat):
    # TODO(synk): FeatureFusionBlock approximated as nearest-upsample + single merged 1x1 conv + ReLU.
    B2, Hc, Wc, _ = cur_feat.shape
    prev_up = jax.image.resize(prev_feat, (B2, Hc, Wc, prev_feat.shape[-1]), method="nearest")
    return conv(p, jnp.concatenate([prev_up, cur_feat], axis=-1), relu=True)


def cnet_proj_forward(p, x):
    # TODO(synk): MobileOneBlock used in its inference-time reparameterized form (1x1 conv + ReLU).
    return conv(p, x, relu=True)


def update_block_forward(p, net, inp, corr, flow, hidden):
    # BasicMotionEncoder
    c = conv(p["enc_c1"], corr, relu=True)
    c = conv(p["enc_c2"], c, padding=(1, 1), relu=True)
    f = conv(p["enc_f1"], flow, padding=(3, 3), relu=True)
    f = conv(p["enc_f2"], f, padding=(1, 1), relu=True)
    m = conv(p["enc_cat"], jnp.concatenate([c, f], axis=-1), padding=(1, 1), relu=True)
    motion = jnp.concatenate([m, flow], axis=-1)
    x = jnp.concatenate([inp, motion], axis=-1)
    # ConvGRU (convz + convr merged into one conv on hx)
    hx = jnp.concatenate([net, x], axis=-1)
    zr = conv(p["convzr"], hx, padding=(1, 1))
    z_pre, r_pre = zr[..., :hidden], zr[..., hidden:]
    rnet = gated_hidden(r_pre, net)                              # fused sigmoid(r) * h
    q_pre = conv(p["convq"], jnp.concatenate([rnet, x], axis=-1), padding=(1, 1))
    net_new = gru_fuse(z_pre, q_pre, net)                        # fused state update
    # heads (flow1 + mask1 merged into one conv)
    dm = conv(p["flowmask1"], net_new, padding=(1, 1), relu=True)
    delta_disp = conv(p["flow2"], dm[..., :128], padding=(1, 1))
    mask = conv(p["mask2"], dm[..., 128:], scale=0.25)           # 0.25 fused into epilogue
    return net_new, mask, delta_disp


# ----------------------------------------------------------------------------- parameters
def _conv_init(key, kh, kw, cin, cout):
    w = jax.random.normal(key, (kh, kw, cin, cout), jnp.float32) / math.sqrt(kh * kw * cin)
    return {"w": w, "b": jnp.zeros((cout,), jnp.float32)}


def make_params(key, hidden, ctx, groups, radius):
    keys = iter(jax.random.split(key, 64))
    nk = lambda: next(keys)
    cor_planes = groups * 1 * (2 * radius + 1)
    return {
        "fnet": {
            "stem": _conv_init(nk(), 3, 3, 3, 16),
            "d1a": _conv_init(nk(), 3, 3, 16, 32),
            "d1b": _conv_init(nk(), 3, 3, 32, 64),
            "d2a": _conv_init(nk(), 3, 3, 64, 128),
            "d2b": _conv_init(nk(), 3, 3, 128, 256),
        },
        "cnet_proj": [
            _conv_init(nk(), 1, 1, 256, 2 * ctx),
            _conv_init(nk(), 1, 1, 64, 2 * ctx),
            _conv_init(nk(), 1, 1, 64, 2 * ctx),
        ],
        "fusion": [
            _conv_init(nk(), 1, 1, 256 + 64, 64),
            _conv_init(nk(), 1, 1, 64 + 16, 64),
        ],
        "update": {
            "enc_c1": _conv_init(nk(), 1, 1, cor_planes, 64),
            "enc_c2": _conv_init(nk(), 3, 3, 64, 48),
            "enc_f1": _conv_init(nk(), 7, 7, 1, 32),
            "enc_f2": _conv_init(nk(), 3, 3, 32, 16),
            "enc_cat": _conv_init(nk(), 3, 3, 64, hidden - 1),
            "convzr": _conv_init(nk(), 3, 3, hidden + ctx + hidden, 2 * hidden),
            "convq": _conv_init(nk(), 3, 3, hidden + ctx + hidden, hidden),
            "flowmask1": _conv_init(nk(), 3, 3, hidden, 256),
            "flow2": _conv_init(nk(), 3, 3, 128, 1),
            "mask2": _conv_init(nk(), 1, 1, 128, 9 * 16),
        },
    }


# ----------------------------------------------------------------------------- full forward (coarse -> fine)
def model_forward(params, frame1, frame2, *, iters=2, radius=4, groups=4, hidden=64, ctx=64):
    B = frame1.shape[0]
    frame_h, frame_w = frame1.shape[1:3]
    x = jnp.concatenate([frame1, frame2], axis=0)
    features = fnet_forward(params["fnet"], x)            # coarse -> fine, each (2B,H,W,C)

    def init_coords(f):
        _, Hf, Wf, _ = f.shape
        return jnp.broadcast_to(
            jnp.arange(Wf, dtype=jnp.float32)[None, None, :, None], (B, Hf, Wf, 1)
        )

    init_c = init_coords(features[0][:B])
    org_c = init_coords(features[0][:B])
    previous_feat = None
    m_outputs = []

    for idx, feat in enumerate(features):
        if previous_feat is not None:
            feat = fusion_forward(params["fusion"][idx - 1], previous_feat, feat)
        fmap1, fmap2 = feat[:B], feat[B:]
        cnet = cnet_proj_forward(params["cnet_proj"][idx], fmap1)
        net, inp = cnet[..., :hidden], cnet[..., hidden:]
        net = jnp.tanh(net)
        inp = jnp.maximum(inp, 0.0)

        corr_vol = grouped_corr_volume(fmap1, fmap2, groups)   # Pallas corr kernel
        coords1 = init_c
        up_disp = None
        for _ in range(iters):
            sampled = sample_corr(corr_vol, coords1, radius)
            net, mask, delta = update_block_forward(
                params["update"], net, inp, sampled, coords1 - org_c, hidden
            )
            coords1 = coords1 + delta
            disp = coords1 - org_c
            up_disp = convex_upsample(disp, mask, rate=(4, 4))  # Pallas upsample kernel
            rate = frame_w / up_disp.shape[2]
            if rate == 1:
                disp_at_org = up_disp
            else:
                disp_at_org = (
                    jax.image.resize(up_disp, (B, frame_h, frame_w, 1), method="nearest") * rate
                )
            m_outputs.append({"up_disp": disp_at_org})

        if idx < len(features) - 1:
            org_c = init_coords(features[idx + 1][:B])
            init_c = org_c + up_disp
            previous_feat = feat

    return m_outputs


# ----------------------------------------------------------------------------- main
if __name__ == "__main__":
    key = jax.random.PRNGKey(0)
    k_param, k_f1, k_f2 = jax.random.split(key, 3)

    B, H, W = 2, 32, 32           # small frames; pyramid levels: 2x2(256ch), 8x8(64ch), 32x32(16ch)
    hidden = ctx = 64
    iters, radius, groups = 2, 4, 4

    params = make_params(k_param, hidden, ctx, groups, radius)
    frame1 = jax.random.normal(k_f1, (B, H, W, 3), jnp.float32)
    frame2 = jax.random.normal(k_f2, (B, H, W, 3), jnp.float32)

    outputs = model_forward(
        params, frame1, frame2, iters=iters, radius=radius, groups=groups, hidden=hidden, ctx=ctx
    )
    for o in outputs:
        jax.block_until_ready(o["up_disp"])

    assert len(outputs) == 3 * iters
    assert outputs[-1]["up_disp"].shape == (B, H, W, 1)
    print("KERNEL_OK")
</pallas_src>

<mosaic_0001>
module attributes {stable_mosaic.version = 11 : i64} {
  func.func @_mm_bias_kernel(%arg0: i32, %arg1: memref<256x27xbf16, #tpu.memory_space<vmem>>, %arg2: memref<27x16xbf16, #tpu.memory_space<vmem>>, %arg3: memref<1x16xf32, #tpu.memory_space<vmem>>, %arg4: memref<256x16xf32, #tpu.memory_space<vmem>>) attributes {dimension_semantics = [#tpu.dimension_semantics<parallel>], iteration_bounds = array<i64: 16>, scalar_prefetch = 0 : i64, scratch_operands = 0 : i64, tpu.core_type = #tpu.core_type<tc>, window_params = [{transform_indices = @transform_0, window_bounds = array<i64: 256, 27>}, {pipeline_mode = #tpu.pipeline_mode<synchronous>, transform_indices = @transform_1, window_bounds = array<i64: 27, 16>}, {pipeline_mode = #tpu.pipeline_mode<synchronous>, transform_indices = @transform_2, window_bounds = array<i64: 1, 16>}, {transform_indices = @transform_3, window_bounds = array<i64: 256, 16>}]} {
    %c0 = arith.constant 0 : index
    %c0_0 = arith.constant 0 : index
    %0 = vector.load %arg1[%c0, %c0_0] : memref<256x27xbf16, #tpu.memory_space<vmem>>, vector<256x27xbf16>
    %c0_1 = arith.constant 0 : index
    %c0_2 = arith.constant 0 : index
    %1 = vector.load %arg2[%c0_1, %c0_2] : memref<27x16xbf16, #tpu.memory_space<vmem>>, vector<27x16xbf16>
    %cst = arith.constant dense<0.000000e+00> : vector<256x16xf32>
    %2 = tpu.matmul %0, %1, %cst {dimension_numbers = #tpu.dot_dimension_numbers<[1], [0], [0], [1], [0, 0, 1, 1], [], []>} : vector<256x27xbf16>, vector<27x16xbf16>, vector<256x16xf32> -> vector<256x16xf32>
    %c0_3 = arith.constant 0 : index
    %c0_4 = arith.constant 0 : index
    %3 = vector.load %arg3[%c0_3, %c0_4] : memref<1x16xf32, #tpu.memory_space<vmem>>, vector<1x16xf32>
    %4 = vector.broadcast %3 : vector<1x16xf32> to vector<256x16xf32>
    %5 = arith.addf %2, %4 : vector<256x16xf32>
    %cst_5 = arith.constant 0.000000e+00 : f32
    %6 = vector.broadcast %cst_5 : f32 to vector<256x16xf32>
    %7 = arith.maximumf %5, %6 : vector<256x16xf32>
    %c0_6 = arith.constant 0 : index
    %c0_7 = arith.constant 0 : index
    %8 = vector.load %arg4[%c0_6, %c0_7] : memref<256x16xf32, #tpu.memory_space<vmem>>, vector<256x16xf32>
    tpu.vector_store %arg4[%c0_6, %c0_7], %7 {strides = array<i32>} : memref<256x16xf32, #tpu.memory_space<vmem>>, vector<256x16xf32>,
    return
  }
  func.func @transform_0(%arg0: i32) -> (i32, i32) {
    %c0_i32 = arith.constant 0 : i32
    %c0_i32_0 = arith.constant 0 : i32
    return %arg0, %c0_i32 : i32, i32
  }
  func.func @transform_1(%arg0: i32) -> (i32, i32) {
    %c0_i32 = arith.constant 0 : i32
    %c0_i32_0 = arith.constant 0 : i32
    %c0_i32_1 = arith.constant 0 : i32
    return %c0_i32, %c0_i32_0 : i32, i32
  }
  func.func @transform_2(%arg0: i32) -> (i32, i32) {
    %c0_i32 = arith.constant 0 : i32
    %c0_i32_0 = arith.constant 0 : i32
    %c0_i32_1 = arith.constant 0 : i32
    return %c0_i32, %c0_i32_0 : i32, i32
  }
  func.func @transform_3(%arg0: i32) -> (i32, i32) {
    %c0_i32 = arith.constant 0 : i32
    %c0_i32_0 = arith.constant 0 : i32
    return %arg0, %c0_i32 : i32, i32
  }
}

</mosaic_0001>

<llo_original>
// kernel: tpu_custom_call.1
$region0: #{tpu_custom_call.1}
  #allocation0 [shape = 'u32[]', space=smem, size = 0x4, offset = 0x4, fixed_abs, tag = 'smem constant byte address 0x4 - core index']
  #allocation1 [shape = 'u32[144,128]{1,0:T(1,128)}', space=vmem, size = 0x12000, scoped, tag = 'internal scratch']
  %s0 = inlined_call_operand.vmem [shape: bf16[4096,27], index: 0, kind: input, shape index: {}]
  %s1 = inlined_call_operand.vmem [shape: bf16[27,16], index: 1, kind: input, shape index: {}]
  %s2 = inlined_call_operand.hbm [shape: f32[1,16], index: 2, kind: input, shape index: {}]
  %s3 = inlined_call_operand.vmem [shape: f32[4096,16], index: 3, kind: output, shape index: {}]
  %s4 = sld [smem:[#allocation0]]
  $region49: #{tpu_custom_call.1} parent=0
    _
  %s6 = ssub.s32 1, %s4
  %s7 = scalar_select 0, %s6, %s4
  $region1: #{tpu_custom_call.1} parent=0
    #allocation2 [shape = 'u8[512]{0}', space=vmem, size = 0x400, scoped, tag = 'input window, operand 2, single buffered']
    #allocation3 [shape = 's32[2]{0}', space=sflag, size = 0x8, scoped, tag = 'scoped memory for tpu_custom_call.1']
    %8 = vsyncpa [#allocation3], 0
    loop: start=0, step=1, limit=18
    $region2: #{tpu_custom_call.1} parent=1 // loop_pre_header
      _
    $region3: #{tpu_custom_call.1} parent=1 // loop_header
      %s10 = sphi 0, %s14
      %p11 = scmp.ge.s32.totalorder %s10, 18
      %s20 = sphi 0, %s22
      %s23 = sphi 0, %s20
      %s24 = sphi 0, %s23
      %s40 = sphi 0, %s24
      %s44 = sphi 0, %s44
      %s46 = sphi 0, %s44
      %s47 = sphi 0, %s46
      %s61 = sphi 0, %s47
      %s65 = sphi 0, %s65
      %s67 = sphi 0, %s65
      %s68 = sphi 0, %s67
      %s82 = sphi 0, %s68
      %s88 = sphi 0, %s90
      %s91 = sphi 0, %s88
      %s92 = sphi 0, %s91
      %s108 = sphi 0, %s92
    $region4: #{tpu_custom_call.1} parent=1 // loop_header_branch
      %13 = sbr.rel (%p11) target = $region8
    $region5: #{tpu_custom_call.1} parent=1 // loop_body
      %s15 = ssub.s32 %s10, 1
      %s16 = ssub.s32 %s10, 2
      %s17 = sadd.s32 %s10, 1
      %s18 = ssub.s32 %s10, %s17
      %p19 = scmp.eq.s32.totalorder %s18, 0
      %s21 = sadd.s32 %s20, 1
      %s22 = scalar_select %p19, %s20, %s21
      %p25 = pneg %p19
      %p26 = scmp.eq.s32.totalorder %s10, 15
      %p27 = por %p25, %p26
      %p28 = scmp.ne.s32.totalorder %s20, %s23
      %p29 = scmp.eq.s32.totalorder %s10, 0
      %p30 = por %p28, %p29
      %p31 = scmp.ne.s32.totalorder %s20, %s23
      %p32 = scmp.eq.s32.totalorder %s15, 15
      %p33 = por %p31, %p32
      %p34 = scmp.ne.s32.totalorder %s23, %s24
      %p35 = scmp.eq.s32.totalorder %s15, 0
      %p36 = por %p34, %p35
      %p37 = scmp.ne.s32.totalorder %s23, %s24
      %p38 = scmp.eq.s32.totalorder %s16, 15
      %p39 = por %p37, %p38
      %p41 = scmp.ne.s32.totalorder %s24, %s40
      %p42 = scmp.eq.s32.totalorder %s16, 0
      %p43 = por %p41, %p42
      %s45 = sadd.s32 %s44, 1
      %p48 = scmp.eq.s32.totalorder %s10, 15
      %p49 = scmp.ne.s32.totalorder %s44, %s46
      %p50 = scmp.eq.s32.totalorder %s10, 0
      %p51 = por %p49, %p50
      %p52 = scmp.ne.s32.totalorder %s44, %s46
      %p53 = scmp.eq.s32.totalorder %s15, 15
      %p54 = por %p52, %p53
      %p55 = scmp.ne.s32.totalorder %s46, %s47
      %p56 = scmp.eq.s32.totalorder %s15, 0
      %p57 = por %p55, %p56
      %p58 = scmp.ne.s32.totalorder %s46, %s47
      %p59 = scmp.eq.s32.totalorder %s16, 15
      %p60 = por %p58, %p59
      %p62 = scmp.ne.s32.totalorder %s47, %s61
      %p63 = scmp.eq.s32.totalorder %s16, 0
      %p64 = por %p62, %p63
      %s66 = sadd.s32 %s65, 1
      %p69 = scmp.eq.s32.totalorder %s10, 15
      %p70 = scmp.ne.s32.totalorder %s65, %s67
      %p71 = scmp.eq.s32.totalorder %s10, 0
      %p72 = por %p70, %p71
      %p73 = scmp.ne.s32.totalorder %s65, %s67
      %p74 = scmp.eq.s32.totalorder %s15, 15
      %p75 = por %p73, %p74
      %p76 = scmp.ne.s32.totalorder %s67, %s68
      %p77 = scmp.eq.s32.totalorder %s15, 0
      %p78 = por %p76, %p77
      %p79 = scmp.ne.s32.totalorder %s67, %s68
      %p80 = scmp.eq.s32.totalorder %s16, 15
      %p81 = por %p79, %p80
      %p83 = scmp.ne.s32.totalorder %s68, %s82
      %p84 = scmp.eq.s32.totalorder %s16, 0
      %p85 = por %p83, %p84
      %s86 = ssub.s32 %s10, %s17
      %p87 = scmp.eq.s32.totalorder %s86, 0
      %s89 = sadd.s32 %s88, 1
      %s90 = scalar_select %p87, %s88, %s89
      %p93 = pneg %p87
      %p94 = scmp.eq.s32.totalorder %s10, 15
      %p95 = por %p93, %p94
      %p96 = scmp.ne.s32.totalorder %s88, %s91
      %p97 = scmp.eq.s32.totalorder %s10, 0
      %p98 = por %p96, %p97
      %p99 = scmp.ne.s32.totalorder %s88, %s91
      %p100 = scmp.eq.s32.totalorder %s15, 15
      %p101 = por %p99, %p100
      %p102 = scmp.ne.s32.totalorder %s91, %s92
      %p103 = scmp.eq.s32.totalorder %s15, 0
      %p104 = por %p102, %p103
      %p105 = scmp.ne.s32.totalorder %s91, %s92
      %p106 = scmp.eq.s32.totalorder %s16, 15
      %p107 = por %p105, %p106
      %p109 = scmp.ne.s32.totalorder %s92, %s108
      %p110 = scmp.eq.s32.totalorder %s16, 0
      %p111 = por %p109, %p110
      %p112 = scmp.le.s32.totalorder 1, %s10
      %p113 = scmp.lt.s32.totalorder %s10, 17
      %p114 = pnand %p112, %p113
      %p115 = pneg %p114
      // Predicated region
      $region9: #{tpu_custom_call.1} parent=5 // pred_check
        _
      $region10: #{tpu_custom_call.1} parent=5 // pred_check_branch
        %117 = sbr.rel (%p114) target = $region12
      $region11: #{tpu_custom_call.1} parent=5 // pred_region
        %s118 = ssub.s32 %s10, 1
        // Predicated region
        $region13: #{tpu_custom_call.1} parent=11 // pred_check
          %p119 = pneg %p57
        $region14: #{tpu_custom_call.1} parent=11 // pred_check_branch
          %121 = sbr.rel (%p119) target = $region16
        $region15: #{tpu_custom_call.1} parent=11 // pred_region
          _
        $region16: #{tpu_custom_call.1} parent=11 // pred_fallthru
          _
        // Predicated region
        $region17: #{tpu_custom_call.1} parent=11 // pred_check
          %p122 = pneg %p78
        $region18: #{tpu_custom_call.1} parent=11 // pred_check_branch
          %124 = sbr.rel (%p122) target = $region20
        $region19: #{tpu_custom_call.1} parent=11 // pred_region
          %s126 = ssub.s32 16, 16
          %127 = vsyncadd [#allocation3], %s126
          %s129 = sshll.u32 [#allocation2], 4
          %s130 = int_to_ptr.vmem [resolvable:$true] %s129
          %132 = dma.hbm_to_vmem [thread:$0]  %s2, 16, %s130, [#allocation3]
        $region20: #{tpu_custom_call.1} parent=11 // pred_fallthru
          _
      $region12: #{tpu_custom_call.1} parent=5 // pred_fallthru
        _
      %p133 = scmp.lt.s32.totalorder %s10, 16
      // Predicated region
      $region21: #{tpu_custom_call.1} parent=5 // pred_check
        %p134 = pneg %p133
      $region22: #{tpu_custom_call.1} parent=5 // pred_check_branch
        %136 = sbr.rel (%p134) target = $region24
      $region23: #{tpu_custom_call.1} parent=5 // pred_region
        // Predicated region
        $region25: #{tpu_custom_call.1} parent=23 // pred_check
          %p137 = pneg %p30
        $region26: #{tpu_custom_call.1} parent=23 // pred_check_branch
          %139 = sbr.rel (%p137) target = $region28
        $region27: #{tpu_custom_call.1} parent=23 // pred_region
          %s140 = smul.u32 32, %s10
          %p141 = scmp.lt.s32.totalorder %s140, 511
          %s142 = scalar_select %p141, %s140, 511
          %s143 = smul.addr %s142, 4
          %s144 = scalar_lea.vmem %s0, %s143
          %s145 = smul.u32 32, %s10
        $region28: #{tpu_custom_call.1} parent=23 // pred_fallthru
          _
      $region24: #{tpu_custom_call.1} parent=5 // pred_fallthru
        _
      %p146 = scmp.le.s32.totalorder 1, %s10
      %p147 = scmp.lt.s32.totalorder %s10, 17
      %p148 = pnand %p146, %p147
      %p149 = pneg %p148
      // Predicated region
      $region29: #{tpu_custom_call.1} parent=5 // pred_check
        _
      $region30: #{tpu_custom_call.1} parent=5 // pred_check_branch
        %151 = sbr.rel (%p148) target = $region32
      $region31: #{tpu_custom_call.1} parent=5 // pred_region
        %s152 = ssub.s32 %s10, 1
        // Predicated region
        $region33: #{tpu_custom_call.1} parent=31 // pred_check
          %p153 = pneg %p78
        $region34: #{tpu_custom_call.1} parent=31 // pred_check_branch
          %155 = sbr.rel (%p153) target = $region36
        $region35: #{tpu_custom_call.1} parent=31 // pred_region
          %156 = dma.done [#allocation3], 16
        $region36: #{tpu_custom_call.1} parent=31 // pred_fallthru
          _
        %s157 = smul.u32 32, %s15
        %p158 = scmp.lt.s32.totalorder %s157, 511
        %s159 = scalar_select %p158, %s157, 511
        %s160 = smul.addr %s159, 4
        %s161 = scalar_lea.vmem %s0, %s160
        %p162 = pneg %p36
        %p163 = pneg %p33
        %p164 = pneg %p57
        %p165 = pneg %p54
        %p166 = pneg %p78
        %p167 = pneg %p75
        %p168 = pneg %p104
        %p169 = pneg %p101
        %s170 = smul.u32 32, %s15
        %p171 = scmp.lt.s32.totalorder %s170, 511
        %s172 = scalar_select %p171, %s170, 511
        %s173 = smul.addr %s172, 8
        %s174 = scalar_lea.vmem %s3, %s173
        %s175 = smul.u32 32, %s15
        %p176 = scmp.lt.s32.totalorder %s175, 511
        %s177 = scalar_select %p176, %s175, 511
        %s178 = smul.addr %s177, 4
        %s179 = scalar_lea.vmem %s0, %s178
        %s180 = smul.u32 32, %s15
        %s181 = smul.u32 32, %s15
        %p182 = scmp.lt.s32.totalorder %s181, 511
        %s183 = scalar_select %p182, %s181, 511
        %s184 = smul.addr %s183, 8
        %s185 = scalar_lea.vmem %s3, %s184
        %s186 = smul.u32 32, %s15
        %v188 = vld [vmem:[%s179] sm:$0xf]
        %v189 = vld [vmem:[%s179 + $0x4] sm:$0xf]
        %v190 = vld [vmem:[%s179 + $0x8] sm:$0xf]
        %v191 = vld [vmem:[%s179 + $0xc] sm:$0xf]
        %v192 = vld [vmem:[%s179 + $0x10] sm:$0xf]
        %v193 = vld [vmem:[%s179 + $0x14] sm:$0xf]
        %v194 = vld [vmem:[%s179 + $0x18] sm:$0xf]
        %v195 = vld [vmem:[%s179 + $0x1c] sm:$0xf]
        %v196 = vld [vmem:[%s179 + $0x20] sm:$0xf]
        %v197 = vld [vmem:[%s179 + $0x24] sm:$0xf]
        %v198 = vld [vmem:[%s179 + $0x28] sm:$0xf]
        %v199 = vld [vmem:[%s179 + $0x2c] sm:$0xf]
        %v200 = vld [vmem:[%s179 + $0x30] sm:$0xf]
        %v201 = vld [vmem:[%s179 + $0x34] sm:$0xf]
        %v202 = vld [vmem:[%s179 + $0x38] sm:$0xf]
        %v203 = vld [vmem:[%s179 + $0x3c] sm:$0xf]
        %v204 = vld [vmem:[%s179 + $0x40] sm:$0xf]
        %v205 = vld [vmem:[%s179 + $0x44] sm:$0xf]
        %v206 = vld [vmem:[%s179 + $0x48] sm:$0xf]
        %v207 = vld [vmem:[%s179 + $0x4c] sm:$0xf]
        %v208 = vld [vmem:[%s179 + $0x50] sm:$0xf]
        %v209 = vld [vmem:[%s179 + $0x54] sm:$0xf]
        %v210 = vld [vmem:[%s179 + $0x58] sm:$0xf]
        %v211 = vld [vmem:[%s179 + $0x5c] sm:$0xf]
        %v212 = vld [vmem:[%s179 + $0x60] sm:$0xf]
        %v213 = vld [vmem:[%s179 + $0x64] sm:$0xf]
        %v214 = vld [vmem:[%s179 + $0x68] sm:$0xf]
        %v215 = vld [vmem:[%s179 + $0x6c] sm:$0xf]
        %v216 = vld [vmem:[%s179 + $0x70] sm:$0xf]
        %v217 = vld [vmem:[%s179 + $0x74] sm:$0xf]
        %v218 = vld [vmem:[%s179 + $0x78] sm:$0xf]
        %v219 = vld [vmem:[%s179 + $0x7c] sm:$0xf]
        %v220 = vld [vmem:[%s1] sm:$0xf]
        %v221 = vld [vmem:[%s1 + $0x4] sm:$0xf]
        %v222 = vld [vmem:[%s1 + $0x8] sm:$0xf]
        %v223 = vld [vmem:[%s1 + $0xc] sm:$0x3]
        %v224 = vld [vmem:[#allocation2] sm:$0x1]
        %v226 = vlaneseq
        %v227 = vshrl.u32 %v226, 7
        %v228 = vsub.s32 0, %v227
        %v229 = vrot.slane %v224, %v228
        %v263 = vunpack.c.l.b16 %v188
        %v264 = vunpack.c.l.b16 %v189
        %v265 = vunpack.c.l.b16 %v190
        %v266 = vunpack.c.l.b16 %v191
        %v267 = vunpack.c.l.b16 %v192
        %v268 = vunpack.c.l.b16 %v193
        %v269 = vunpack.c.l.b16 %v194
        %v270 = vunpack.c.l.b16 %v195
        %v271 = vunpack.c.l.b16 %v196
        %v272 = vunpack.c.l.b16 %v197
        %v273 = vunpack.c.l.b16 %v198
        %v274 = vunpack.c.l.b16 %v199
        %v275 = vunpack.c.l.b16 %v200
        %v276 = vunpack.c.l.b16 %v201
        %v277 = vunpack.c.l.b16 %v202
        %v278 = vunpack.c.l.b16 %v203
        %v279 = vunpack.c.l.b16 %v204
        %v280 = vunpack.c.l.b16 %v205
        %v281 = vunpack.c.l.b16 %v206
        %v282 = vunpack.c.l.b16 %v207
        %v283 = vunpack.c.l.b16 %v208
        %v284 = vunpack.c.l.b16 %v209
        %v285 = vunpack.c.l.b16 %v210
        %v286 = vunpack.c.l.b16 %v211
        %v287 = vunpack.c.l.b16 %v212
        %v288 = vunpack.c.l.b16 %v213
        %v289 = vunpack.c.l.b16 %v214
        %v290 = vunpack.c.l.b16 %v215
        %v291 = vunpack.c.l.b16 %v216
        %v292 = vunpack.c.l.b16 %v217
        %v293 = vunpack.c.l.b16 %v218
        %v294 = vunpack.c.l.b16 %v219
        %v295 = vpack.c.b16 %v264, %v263
        %v296 = vpack.c.b16 %v266, %v265
        %v297 = vpack.c.b16 %v268, %v267
        %v298 = vpack.c.b16 %v270, %v269
        %v299 = vpack.c.b16 %v272, %v271
        %v300 = vpack.c.b16 %v274, %v273
        %v301 = vpack.c.b16 %v276, %v275
        %v302 = vpack.c.b16 %v278, %v277
        %v303 = vpack.c.b16 %v280, %v279
        %v304 = vpack.c.b16 %v282, %v281
        %v305 = vpack.c.b16 %v284, %v283
        %v306 = vpack.c.b16 %v286, %v285
        %v307 = vpack.c.b16 %v288, %v287
        %v308 = vpack.c.b16 %v290, %v289
        %v309 = vpack.c.b16 %v292, %v291
        %v310 = vpack.c.b16 %v294, %v293
        %v315 = vunpack.c.l.b16 %v220
        %v316 = vunpack.c.l.b16 %v221
        %v317 = vunpack.c.l.b16 %v222
        %v318 = vunpack.c.l.b16 %v223
        %v319 = vpack.c.b16 %v316, %v315
        %v320 = vpack.c.b16 %v318, %v317
        %vm322 = vcmask 220160
        %v324 = vsel %vm322, %v295, 0
        %v327 = vsel %vm322, %v296, 0
        %v330 = vsel %vm322, %v297, 0
        %v333 = vsel %vm322, %v298, 0
        %v336 = vsel %vm322, %v299, 0
        %v339 = vsel %vm322, %v300, 0
        %v342 = vsel %vm322, %v301, 0
        %v345 = vsel %vm322, %v302, 0
        %v348 = vsel %vm322, %v303, 0
        %v351 = vsel %vm322, %v304, 0
        %v354 = vsel %vm322, %v305, 0
        %v357 = vsel %vm322, %v306, 0
        %v360 = vsel %vm322, %v307, 0
        %v363 = vsel %vm322, %v308, 0
        %v366 = vsel %vm322, %v309, 0
        %v369 = vsel %vm322, %v310, 0
        %vm371 = vcmask 1044480
        %vm372 = vcmask 1045504
        %v373 = vsel %vm371, 4294967295, 65535
        %v374 = vsel %vm372, %v373, 0
        %v376 = vand.u32 %v320, %v374
        %378 = vmatprep.subr.bf16.mxu0 0
        %379 = vmatpush1.bf16.msra.mxu0 0
        %380 = vmatprep.subr.bf16.mxu0 0
        %381 = vmatpush1.bf16.msra.mxu0 0
        %382 = vmatprep.subr.bf16.mxu0 0
        %383 = vmatpush1.bf16.msra.mxu0 0
        %384 = vmatprep.subr.bf16.mxu0 0
        %385 = vmatpush1.bf16.msra.mxu0 0
        %386 = vmatprep.subr.bf16.mxu0 0
        %387 = vmatpush1.bf16.msra.mxu0 0
        %388 = vmatprep.subr.bf16.mxu0 0
        %389 = vmatpush1.bf16.msra.mxu0 0
        %390 = vmatprep.subr.bf16.mxu0 0
        %391 = vmatpush1.bf16.msra.mxu0 %v376
        %392 = vmatprep.subr.bf16.mxu0 0
        %393 = vmatpush1.bf16.msra.mxu0 %v319
        %394 = vmatprep.subr.bf16.mxu0 0
        %395 = vmatpush2.bf16.msra.mxu0 0
        %396 = vmatprep.subr.bf16.mxu0 0
        %397 = vmatpush2.bf16.msra.mxu0 0
        %398 = vmatprep.subr.bf16.mxu0 0
        %399 = vmatpush2.bf16.msra.mxu0 0
        %400 = vmatprep.subr.bf16.mxu0 0
        %401 = vmatpush2.bf16.msra.mxu0 0
        %402 = vmatprep.subr.bf16.mxu0 0
        %403 = vmatpush2.bf16.msra.mxu0 0
        %404 = vmatprep.subr.bf16.mxu0 0
        %405 = vmatpush2.bf16.msra.mxu0 0
        %406 = vmatprep.subr.bf16.mxu0 0
        %407 = vmatpush2.bf16.msra.mxu0 0
        %408 = vmatprep.subr.bf16.mxu0 0
        %409 = vmatpush2.bf16.msra.mxu0 0
        %410 = vmatprep.mubr.bf16.mxu0 0
        %411 = vmatmul.mubr.bf16.gmra.mxu0 %v324
        %v412 = vpop.f32.mrf.mxu0
        %v413 = vadd.f32 %v229, %v412
        %v414 = vpop.f32.mrf.mxu0
        %v415 = vpop.f32.mrf.mxu0
        %v416 = vadd.f32 %v229, %v415
        %v417 = vpop.f32.mrf.mxu0
        %418 = vmatprep.mubr.bf16.mxu0 0
        %419 = vmatmul.mubr.bf16.gmra.mxu0 %v327
        %v420 = vpop.f32.mrf.mxu0
        %v421 = vadd.f32 %v229, %v420
        %v422 = vpop.f32.mrf.mxu0
        %v423 = vpop.f32.mrf.mxu0
        %v424 = vadd.f32 %v229, %v423
        %v425 = vpop.f32.mrf.mxu0
        %426 = vmatprep.mubr.bf16.mxu0 0
        %427 = vmatmul.mubr.bf16.gmra.mxu0 %v330
        %v428 = vpop.f32.mrf.mxu0
        %v429 = vadd.f32 %v229, %v428
        %v430 = vpop.f32.mrf.mxu0
        %v431 = vpop.f32.mrf.mxu0
        %v432 = vadd.f32 %v229, %v431
        %v433 = vpop.f32.mrf.mxu0
        %434 = vmatprep.mubr.bf16.mxu0 0
        %435 = vmatmul.mubr.bf16.gmra.mxu0 %v333
        %v436 = vpop.f32.mrf.mxu0
        %v437 = vadd.f32 %v229, %v436
        %v438 = vpop.f32.mrf.mxu0
        %v439 = vpop.f32.mrf.mxu0
        %v440 = vadd.f32 %v229, %v439
        %v441 = vpop.f32.mrf.mxu0
        %442 = vmatprep.mubr.bf16.mxu0 0
        %443 = vmatmul.mubr.bf16.gmra.mxu0 %v336
        %v444 = vpop.f32.mrf.mxu0
        %v445 = vadd.f32 %v229, %v444
        %v446 = vpop.f32.mrf.mxu0
        %v447 = vpop.f32.mrf.mxu0
        %v448 = vadd.f32 %v229, %v447
        %v449 = vpop.f32.mrf.mxu0
        %450 = vmatprep.mubr.bf16.mxu0 0
        %451 = vmatmul.mubr.bf16.gmra.mxu0 %v339
        %v452 = vpop.f32.mrf.mxu0
        %v453 = vadd.f32 %v229, %v452
        %v454 = vpop.f32.mrf.mxu0
        %v455 = vpop.f32.mrf.mxu0
        %v456 = vadd.f32 %v229, %v455
        %v457 = vpop.f32.mrf.mxu0
        %458 = vmatprep.mubr.bf16.mxu0 0
        %459 = vmatmul.mubr.bf16.gmra.mxu0 %v342
        %v460 = vpop.f32.mrf.mxu0
        %v461 = vadd.f32 %v229, %v460
        %v462 = vpop.f32.mrf.mxu0
        %v463 = vpop.f32.mrf.mxu0
        %v464 = vadd.f32 %v229, %v463
        %v465 = vpop.f32.mrf.mxu0
        %466 = vmatprep.mubr.bf16.mxu0 0
        %467 = vmatmul.mubr.bf16.gmra.mxu0 %v345
        %v468 = vpop.f32.mrf.mxu0
        %v469 = vadd.f32 %v229, %v468
        %v470 = vpop.f32.mrf.mxu0
        %v471 = vpop.f32.mrf.mxu0
        %v472 = vadd.f32 %v229, %v471
        %v473 = vpop.f32.mrf.mxu0
        %474 = vmatprep.mubr.bf16.mxu0 0
        %475 = vmatmul.mubr.bf16.gmra.mxu0 %v348
        %v476 = vpop.f32.mrf.mxu0
        %v477 = vadd.f32 %v229, %v476
        %v478 = vpop.f32.mrf.mxu0
        %v479 = vpop.f32.mrf.mxu0
        %v480 = vadd.f32 %v229, %v479
        %v481 = vpop.f32.mrf.mxu0
        %482 = vmatprep.mubr.bf16.mxu0 0
        %483 = vmatmul.mubr.bf16.gmra.mxu0 %v351
        %v484 = vpop.f32.mrf.mxu0
        %v485 = vadd.f32 %v229, %v484
        %v486 = vpop.f32.mrf.mxu0
        %v487 = vpop.f32.mrf.mxu0
        %v488 = vadd.f32 %v229, %v487
        %v489 = vpop.f32.mrf.mxu0
        %490 = vmatprep.mubr.bf16.mxu0 0
        %491 = vmatmul.mubr.bf16.gmra.mxu0 %v354
        %v492 = vpop.f32.mrf.mxu0
        %v493 = vadd.f32 %v229, %v492
        %v494 = vpop.f32.mrf.mxu0
        %v495 = vpop.f32.mrf.mxu0
        %v496 = vadd.f32 %v229, %v495
        %v497 = vpop.f32.mrf.mxu0
        %498 = vmatprep.mubr.bf16.mxu0 0
        %499 = vmatmul.mubr.bf16.gmra.mxu0 %v357
        %v500 = vpop.f32.mrf.mxu0
        %v501 = vadd.f32 %v229, %v500
        %v502 = vpop.f32.mrf.mxu0
        %v503 = vpop.f32.mrf.mxu0
        %v504 = vadd.f32 %v229, %v503
        %v505 = vpop.f32.mrf.mxu0
        %506 = vmatprep.mubr.bf16.mxu0 0
        %507 = vmatmul.mubr.bf16.gmra.mxu0 %v360
        %v508 = vpop.f32.mrf.mxu0
        %v509 = vadd.f32 %v229, %v508
        %v510 = vpop.f32.mrf.mxu0
        %v511 = vpop.f32.mrf.mxu0
        %v512 = vadd.f32 %v229, %v511
        %v513 = vpop.f32.mrf.mxu0
        %514 = vmatprep.mubr.bf16.mxu0 0
        %515 = vmatmul.mubr.bf16.gmra.mxu0 %v363
        %v516 = vpop.f32.mrf.mxu0
        %v517 = vadd.f32 %v229, %v516
        %v518 = vpop.f32.mrf.mxu0
        %v519 = vpop.f32.mrf.mxu0
        %v520 = vadd.f32 %v229, %v519
        %v521 = vpop.f32.mrf.mxu0
        %522 = vmatprep.mubr.bf16.mxu0 0
        %523 = vmatmul.mubr.bf16.gmra.mxu0 %v366
        %v524 = vpop.f32.mrf.mxu0
        %v525 = vadd.f32 %v229, %v524
        %v526 = vpop.f32.mrf.mxu0
        %v527 = vpop.f32.mrf.mxu0
        %v528 = vadd.f32 %v229, %v527
        %v529 = vpop.f32.mrf.mxu0
        %530 = vmatprep.mubr.bf16.mxu0 0
        %531 = vmatmul.mubr.bf16.gmra.mxu0 %v369
        %v532 = vpop.f32.mrf.mxu0
        %v533 = vadd.f32 %v229, %v532
        %v534 = vpop.f32.mrf.mxu0
        %v535 = vpop.f32.mrf.mxu0
        %v536 = vadd.f32 %v229, %v535
        %v537 = vpop.f32.mrf.mxu0
        %538 = vdwg.mxu0
        %v539 = vmax.f32 %v413, 0.0
        %v540 = vmax.f32 %v416, 0.0
        %v541 = vmax.f32 %v421, 0.0
        %v542 = vmax.f32 %v424, 0.0
        %v543 = vmax.f32 %v429, 0.0
        %v544 = vmax.f32 %v432, 0.0
        %v545 = vmax.f32 %v437, 0.0
        %v546 = vmax.f32 %v440, 0.0
        %v547 = vmax.f32 %v445, 0.0
        %v548 = vmax.f32 %v448, 0.0
        %v549 = vmax.f32 %v453, 0.0
        %v550 = vmax.f32 %v456, 0.0
        %v551 = vmax.f32 %v461, 0.0
        %v552 = vmax.f32 %v464, 0.0
        %v553 = vmax.f32 %v469, 0.0
        %v554 = vmax.f32 %v472, 0.0
        %v555 = vmax.f32 %v477, 0.0
        %v556 = vmax.f32 %v480, 0.0
        %v557 = vmax.f32 %v485, 0.0
        %v558 = vmax.f32 %v488, 0.0
        %v559 = vmax.f32 %v493, 0.0
        %v560 = vmax.f32 %v496, 0.0
        %v561 = vmax.f32 %v501, 0.0
        %v562 = vmax.f32 %v504, 0.0
        %v563 = vmax.f32 %v509, 0.0
        %v564 = vmax.f32 %v512, 0.0
        %v565 = vmax.f32 %v517, 0.0
        %v566 = vmax.f32 %v520, 0.0
        %v567 = vmax.f32 %v525, 0.0
        %v568 = vmax.f32 %v528, 0.0
        %v569 = vmax.f32 %v533, 0.0
        %v570 = vmax.f32 %v536, 0.0
        %vm571 = vcmask 130048
        %572 = vst.msk [vmem:[%s185] sm:$0xff] %vm571, %v539
        %573 = vst.msk [vmem:[%s185 + $0x8] sm:$0xff] %vm571, %v540
        %574 = vst.msk [vmem:[%s185 + $0x10] sm:$0xff] %vm571, %v541
        %575 = vst.msk [vmem:[%s185 + $0x18] sm:$0xff] %vm571, %v542
        %576 = vst.msk [vmem:[%s185 + $0x20] sm:$0xff] %vm571, %v543
        %577 = vst.msk [vmem:[%s185 + $0x28] sm:$0xff] %vm571, %v544
        %578 = vst.msk [vmem:[%s185 + $0x30] sm:$0xff] %vm571, %v545
        %579 = vst.msk [vmem:[%s185 + $0x38] sm:$0xff] %vm571, %v546
        %580 = vst.msk [vmem:[%s185 + $0x40] sm:$0xff] %vm571, %v547
        %581 = vst.msk [vmem:[%s185 + $0x48] sm:$0xff] %vm571, %v548
        %582 = vst.msk [vmem:[%s185 + $0x50] sm:$0xff] %vm571, %v549
        %583 = vst.msk [vmem:[%s185 + $0x58] sm:$0xff] %vm571, %v550
        %584 = vst.msk [vmem:[%s185 + $0x60] sm:$0xff] %vm571, %v551
        %585 = vst.msk [vmem:[%s185 + $0x68] sm:$0xff] %vm571, %v552
        %586 = vst.msk [vmem:[%s185 + $0x70] sm:$0xff] %vm571, %v553
        %587 = vst.msk [vmem:[%s185 + $0x78] sm:$0xff] %vm571, %v554
        %588 = vst.msk [vmem:[%s185 + $0x80] sm:$0xff] %vm571, %v555
        %589 = vst.msk [vmem:[%s185 + $0x88] sm:$0xff] %vm571, %v556
        %590 = vst.msk [vmem:[%s185 + $0x90] sm:$0xff] %vm571, %v557
        %591 = vst.msk [vmem:[%s185 + $0x98] sm:$0xff] %vm571, %v558
        %592 = vst.msk [vmem:[%s185 + $0xa0] sm:$0xff] %vm571, %v559
        %593 = vst.msk [vmem:[%s185 + $0xa8] sm:$0xff] %vm571, %v560
        %594 = vst.msk [vmem:[%s185 + $0xb0] sm:$0xff] %vm571, %v561
        %595 = vst.msk [vmem:[%s185 + $0xb8] sm:$0xff] %vm571, %v562
        %596 = vst.msk [vmem:[%s185 + $0xc0] sm:$0xff] %vm571, %v563
        %597 = vst.msk [vmem:[%s185 + $0xc8] sm:$0xff] %vm571, %v564
        %598 = vst.msk [vmem:[%s185 + $0xd0] sm:$0xff] %vm571, %v565
        %599 = vst.msk [vmem:[%s185 + $0xd8] sm:$0xff] %vm571, %v566
        %600 = vst.msk [vmem:[%s185 + $0xe0] sm:$0xff] %vm571, %v567
        %601 = vst.msk [vmem:[%s185 + $0xe8] sm:$0xff] %vm571, %v568
        %602 = vst.msk [vmem:[%s185 + $0xf0] sm:$0xff] %vm571, %v569
        %603 = vst.msk [vmem:[%s185 + $0xf8] sm:$0xff] %vm571, %v570
        %s604 = smul.u32 32, %s15
        %p605 = scmp.lt.s32.totalorder %s604, 511
        %s606 = scalar_select %p605, %s604, 511
        %s607 = smul.addr %s606, 8
        %s608 = scalar_lea.vmem %s3, %s607
        // Predicated region
        $region37: #{tpu_custom_call.1} parent=31 // pred_check
          %p609 = pneg %p101
        $region38: #{tpu_custom_call.1} parent=31 // pred_check_branch
          %611 = sbr.rel (%p609) target = $region40
        $region39: #{tpu_custom_call.1} parent=31 // pred_region
          %s612 = smul.u32 32, %s15
        $region40: #{tpu_custom_call.1} parent=31 // pred_fallthru
          _
      $region32: #{tpu_custom_call.1} parent=5 // pred_fallthru
        _
      %p613 = scmp.le.s32.totalorder 2, %s10
      // Predicated region
      $region41: #{tpu_custom_call.1} parent=5 // pred_check
        %p614 = pneg %p613
      $region42: #{tpu_custom_call.1} parent=5 // pred_check_branch
        %616 = sbr.rel (%p614) target = $region44
      $region43: #{tpu_custom_call.1} parent=5 // pred_region
        %s617 = ssub.s32 %s10, 2
        // Predicated region
        $region45: #{tpu_custom_call.1} parent=43 // pred_check
          %p618 = pneg %p107
        $region46: #{tpu_custom_call.1} parent=43 // pred_check_branch
          %620 = sbr.rel (%p618) target = $region48
        $region47: #{tpu_custom_call.1} parent=43 // pred_region
          %s621 = smul.u32 32, %s16
          %p622 = scmp.lt.s32.totalorder %s621, 511
          %s623 = scalar_select %p622, %s621, 511
          %s624 = smul.addr %s623, 8
          %s625 = scalar_lea.vmem %s3, %s624
        $region48: #{tpu_custom_call.1} parent=43 // pred_fallthru
          _
      $region44: #{tpu_custom_call.1} parent=5 // pred_fallthru
        _
    $region6: #{tpu_custom_call.1} parent=1 // loop_footer
      %s14 = sadd.s32 1, %s10
    $region7: #{tpu_custom_call.1} parent=1 // loop_footer_branch
      %9 = sbr.rel target = $region3
    $region8: #{tpu_custom_call.1} parent=1 // loop_exit
      _
    %626 = vsyncpa [#allocation3], 1
    %s627 = scalar_lea.sflag [#allocation3], 1
    %628 = vsyncpa %s627, 1

</llo_original>
